<compile_context>
chip_gen: v6e
topology: v6e:2x2x1
jax: 0.10.0
libtpu: 0.0.40
codegen_flags: <defaults>
</compile_context>

<pallas_src>
import functools

import jax
import jax.numpy as jnp
from jax.experimental import pallas as pl
from jax.experimental.pallas import tpu as pltpu


# ---------------------------------------------------------------------------
# Fused kernel: embedding gather + context mean + tiled linear layer
# ---------------------------------------------------------------------------
def cbow_kernel(ids_ref, emb_ref, wt_ref, bias_ref, out_ref, avg_ref, *, B, C):
    # ids_ref  : SMEM (B*C,) int32   scalar-prefetched context ids, (b, c) row-major
    # emb_ref  : VMEM (V, E)  f32    embedding table (resident across all V tiles)
    # wt_ref   : VMEM (E, tn) bf16   streamed weight tile
    # bias_ref : VMEM (1, tn) f32    bias tile
    # out_ref  : VMEM (B, tn) f32    logits tile
    # avg_ref  : VMEM (B, E)  f32    scratch holding the context-mean embeddings
    inv_c = jnp.float32(1.0 / C)

    # In-VMEM gather + mean: B*C dynamic-slice row reads, accumulated in f32.
    # Recomputed each V tile (cheap; hidden under the weight-tile DMA) so the
    # grid axis can stay "parallel" on megacore parts.
    for b in range(B):
        s = emb_ref[pl.ds(ids_ref[b * C], 1), :].astype(jnp.float32)
        for c in range(1, C):
            s = s + emb_ref[pl.ds(ids_ref[b * C + c], 1), :].astype(jnp.float32)
        avg_ref[pl.ds(b, 1), :] = s * inv_c

    avg = avg_ref[...]                                       # (B, E) f32
    acc = jnp.dot(avg.astype(wt_ref.dtype), wt_ref[...],     # MXU, f32 accumulate
                  preferred_element_type=jnp.float32)
    out_ref[...] = acc + bias_ref[...]


# ---------------------------------------------------------------------------
# Tiling / VMEM sizing helpers
# ---------------------------------------------------------------------------
def _choose_tile_n(V, max_tn=2048, min_tiles=8):
    """Lane-dense vocab tile: single tile for small V, otherwise multiples of
    128 that keep >= min_tiles grid steps so weight streaming can pipeline."""
    if V <= max_tn or V % 128 != 0:
        return V
    tn = 128
    while (tn * 2 <= max_tn) and (V % (tn * 2) == 0) and (V // (tn * 2) >= min_tiles):
        tn *= 2
    return tn


def _vmem_limit_bytes(V, E, B, tn, emb_itemsize):
    footprint = (
        2 * V * E * emb_itemsize     # resident embedding table (worst-case 2 bufs)
        + 2 * E * tn * 2             # streamed bf16 weight tile, double-buffered
        + 2 * tn * 4                 # bias tile
        + 2 * B * tn * 4             # output tile
        + B * E * 4                  # avg scratch
    )
    # Sized from the actual footprint with 2x headroom; never claim all of
    # v7x's 64 MiB per-TC VMEM.
    return min(64 * 1024 * 1024, max(16 * 1024 * 1024, 2 * footprint))


# ---------------------------------------------------------------------------
# Wrappers
# ---------------------------------------------------------------------------
def prepare_params(emb_table, linear_w, linear_b):
    """One-time parameter preparation (NOT in the per-call path):
    pre-transpose/cast the nn.Linear weight to a streamable (E, V) bf16 slab."""
    V, E = linear_w.shape
    emb = jnp.asarray(emb_table, jnp.float32)                       # (V, E)
    wt = jnp.asarray(linear_w, jnp.float32).T.astype(jnp.bfloat16)  # (E, V)
    bias = jnp.asarray(linear_b, jnp.float32).reshape(1, V)         # (1, V)
    return emb, wt, bias


def cbow_forward(context_words, emb_table, wt_bf16, bias_2d, *, tn=None):
    """CBOW forward: (B, C) ids -> (B, V) f32 logits."""
    B, C = context_words.shape
    V, E = emb_table.shape
    assert wt_bf16.shape == (E, V) and bias_2d.shape == (1, V)
    if tn is None:
        tn = _choose_tile_n(V)

    # Clamp ids so a bad token can never become an unchecked VMEM read.
    ids = jnp.clip(context_words.reshape(B * C).astype(jnp.int32), 0, V - 1)

    # TODO(synk): for embedding tables larger than a few MiB (and > ~1/4 of
    # v7x's 64 MiB per-TC VMEM) switch to an HBM-resident table with chunked,
    # shared-semaphore DMA gather instead of the VMEM-resident path here.
    # TODO(synk): at tiny B the matmul M-dim pads the MXU height; stack
    # micro-batches so M >= 128/256 per call if this stage becomes compute-bound.

    kernel = functools.partial(cbow_kernel, B=B, C=C)
    cost = pl.CostEstimate(
        flops=2 * B * E * V,
        transcendentals=0,
        bytes_accessed=(V * E * emb_table.dtype.itemsize  # table
                        + E * V * 2                       # bf16 weight stream
                        + V * 4                           # bias
                        + B * V * 4                       # logits
                        + B * C * 4),                     # ids
    )
    return pl.pallas_call(
        kernel,
        out_shape=jax.ShapeDtypeStruct((B, V), jnp.float32),
        grid_spec=pltpu.PrefetchScalarGridSpec(
            num_scalar_prefetch=1,
            grid=(V // tn,),
            in_specs=[
                pl.BlockSpec((V, E), lambda j, ids: (0, 0)),   # emb table, resident
                pl.BlockSpec((E, tn), lambda j, ids: (0, j)),  # streamed weight tile
                pl.BlockSpec((1, tn), lambda j, ids: (0, j)),  # bias tile
            ],
            out_specs=pl.BlockSpec((B, tn), lambda j, ids: (0, j)),
            scratch_shapes=[pltpu.VMEM((B, E), jnp.float32)],
        ),
        compiler_params=pltpu.CompilerParams(
            dimension_semantics=("parallel",),                 # V tiles independent
            vmem_limit_bytes=_vmem_limit_bytes(V, E, B, tn, emb_table.dtype.itemsize),
        ),
        cost_estimate=cost,
    )(ids, emb_table, wt_bf16, bias_2d)


if __name__ == "__main__":
    vocab_size = 512
    embedding_dim = 32
    context_size = 2
    C = 2 * context_size          # CBOW context window (left + right)
    B = 8                         # batch

    key = jax.random.PRNGKey(0)
    k_emb, k_w, k_b, k_ctx = jax.random.split(key, 4)

    # Deterministic parameter init (shapes match nn.Embedding / nn.Linear).
    emb_table = jax.random.normal(k_emb, (vocab_size, embedding_dim), jnp.float32)
    bound = 1.0 / (embedding_dim ** 0.5)
    linear_w = jax.random.uniform(k_w, (vocab_size, embedding_dim), jnp.float32,
                                  -bound, bound)
    linear_b = jax.random.uniform(k_b, (vocab_size,), jnp.float32, -bound, bound)
    context_words = jax.random.randint(k_ctx, (B, C), 0, vocab_size, jnp.int32)

    # Weight transpose/cast happens once, outside the jitted per-call path.
    emb_p, wt_p, bias_p = prepare_params(emb_table, linear_w, linear_b)

    fwd = jax.jit(cbow_forward)
    out = jax.block_until_ready(fwd(context_words, emb_p, wt_p, bias_p))

    # Pure-JAX f32 reference of the PyTorch forward.
    ref = emb_table[context_words].mean(axis=1) @ linear_w.T + linear_b

    assert out.shape == (B, vocab_size)
    # bf16 weight/activation stream -> ~1e-2 relative tolerance on logits.
    assert jnp.allclose(out, ref, atol=3e-2, rtol=3e-2), "mismatch vs reference"
    print("KERNEL_OK")
</pallas_src>

<mosaic_0001>
module attributes {stable_mosaic.version = 11 : i64} {
  func.func @cbow_kernel(%arg0: i32, %arg1: memref<32xi32, #tpu.memory_space<smem>>, %arg2: memref<512x32xf32, #tpu.memory_space<vmem>>, %arg3: memref<32x512xbf16, #tpu.memory_space<vmem>>, %arg4: memref<1x512xf32, #tpu.memory_space<vmem>>, %arg5: memref<8x512xf32, #tpu.memory_space<vmem>>, %arg6: memref<8x32xf32, #tpu.memory_space<vmem>>) attributes {dimension_semantics = [#tpu.dimension_semantics<parallel>], iteration_bounds = array<i64: 1>, scalar_prefetch = 1 : i64, scratch_operands = 1 : i64, tpu.core_type = #tpu.core_type<tc>, window_params = [{pipeline_mode = #tpu.pipeline_mode<synchronous>, transform_indices = @transform_0, window_bounds = array<i64: 512, 32>}, {transform_indices = @transform_1, window_bounds = array<i64: 32, 512>}, {transform_indices = @transform_2, window_bounds = array<i64: 1, 512>}, {transform_indices = @transform_3, window_bounds = array<i64: 8, 512>}]} {
    %c0 = arith.constant 0 : index
    %0 = memref.load %arg1[%c0] : memref<32xi32, #tpu.memory_space<smem>>
    %1 = arith.index_cast %0 : i32 to index
    %c0_0 = arith.constant 0 : index
    %2 = vector.load %arg2[%1, %c0_0] : memref<512x32xf32, #tpu.memory_space<vmem>>, vector<1x32xf32>
    %c1 = arith.constant 1 : index
    %3 = memref.load %arg1[%c1] : memref<32xi32, #tpu.memory_space<smem>>
    %4 = arith.index_cast %3 : i32 to index
    %c0_1 = arith.constant 0 : index
    %5 = vector.load %arg2[%4, %c0_1] : memref<512x32xf32, #tpu.memory_space<vmem>>, vector<1x32xf32>
    %6 = arith.addf %2, %5 : vector<1x32xf32>
    %c2 = arith.constant 2 : index
    %7 = memref.load %arg1[%c2] : memref<32xi32, #tpu.memory_space<smem>>
    %8 = arith.index_cast %7 : i32 to index
    %c0_2 = arith.constant 0 : index
    %9 = vector.load %arg2[%8, %c0_2] : memref<512x32xf32, #tpu.memory_space<vmem>>, vector<1x32xf32>
    %10 = arith.addf %6, %9 : vector<1x32xf32>
    %c3 = arith.constant 3 : index
    %11 = memref.load %arg1[%c3] : memref<32xi32, #tpu.memory_space<smem>>
    %12 = arith.index_cast %11 : i32 to index
    %c0_3 = arith.constant 0 : index
    %13 = vector.load %arg2[%12, %c0_3] : memref<512x32xf32, #tpu.memory_space<vmem>>, vector<1x32xf32>
    %14 = arith.addf %10, %13 : vector<1x32xf32>
    %cst = arith.constant 2.500000e-01 : f32
    %15 = vector.broadcast %cst : f32 to vector<1x32xf32>
    %16 = arith.mulf %14, %15 : vector<1x32xf32>
    %c0_4 = arith.constant 0 : index
    %c0_5 = arith.constant 0 : index
    %17 = vector.load %arg6[%c0_4, %c0_5] : memref<8x32xf32, #tpu.memory_space<vmem>>, vector<1x32xf32>
    tpu.vector_store %arg6[%c0_4, %c0_5], %16 {strides = array<i32>} : memref<8x32xf32, #tpu.memory_space<vmem>>, vector<1x32xf32>,
    %c4 = arith.constant 4 : index
    %18 = memref.load %arg1[%c4] : memref<32xi32, #tpu.memory_space<smem>>
    %19 = arith.index_cast %18 : i32 to index
    %c0_6 = arith.constant 0 : index
    %20 = vector.load %arg2[%19, %c0_6] : memref<512x32xf32, #tpu.memory_space<vmem>>, vector<1x32xf32>
    %c5 = arith.constant 5 : index
    %21 = memref.load %arg1[%c5] : memref<32xi32, #tpu.memory_space<smem>>
    %22 = arith.index_cast %21 : i32 to index
    %c0_7 = arith.constant 0 : index
    %23 = vector.load %arg2[%22, %c0_7] : memref<512x32xf32, #tpu.memory_space<vmem>>, vector<1x32xf32>
    %24 = arith.addf %20, %23 : vector<1x32xf32>
    %c6 = arith.constant 6 : index
    %25 = memref.load %arg1[%c6] : memref<32xi32, #tpu.memory_space<smem>>
    %26 = arith.index_cast %25 : i32 to index
    %c0_8 = arith.constant 0 : index
    %27 = vector.load %arg2[%26, %c0_8] : memref<512x32xf32, #tpu.memory_space<vmem>>, vector<1x32xf32>
    %28 = arith.addf %24, %27 : vector<1x32xf32>
    %c7 = arith.constant 7 : index
    %29 = memref.load %arg1[%c7] : memref<32xi32, #tpu.memory_space<smem>>
    %30 = arith.index_cast %29 : i32 to index
    %c0_9 = arith.constant 0 : index
    %31 = vector.load %arg2[%30, %c0_9] : memref<512x32xf32, #tpu.memory_space<vmem>>, vector<1x32xf32>
    %32 = arith.addf %28, %31 : vector<1x32xf32>
    %cst_10 = arith.constant 2.500000e-01 : f32
    %33 = vector.broadcast %cst_10 : f32 to vector<1x32xf32>
    %34 = arith.mulf %32, %33 : vector<1x32xf32>
    %c1_11 = arith.constant 1 : index
    %c0_12 = arith.constant 0 : index
    %35 = vector.load %arg6[%c1_11, %c0_12] : memref<8x32xf32, #tpu.memory_space<vmem>>, vector<1x32xf32>
    tpu.vector_store %arg6[%c1_11, %c0_12], %34 {strides = array<i32>} : memref<8x32xf32, #tpu.memory_space<vmem>>, vector<1x32xf32>,
    %c8 = arith.constant 8 : index
    %36 = memref.load %arg1[%c8] : memref<32xi32, #tpu.memory_space<smem>>
    %37 = arith.index_cast %36 : i32 to index
    %c0_13 = arith.constant 0 : index
    %38 = vector.load %arg2[%37, %c0_13] : memref<512x32xf32, #tpu.memory_space<vmem>>, vector<1x32xf32>
    %c9 = arith.constant 9 : index
    %39 = memref.load %arg1[%c9] : memref<32xi32, #tpu.memory_space<smem>>
    %40 = arith.index_cast %39 : i32 to index
    %c0_14 = arith.constant 0 : index
    %41 = vector.load %arg2[%40, %c0_14] : memref<512x32xf32, #tpu.memory_space<vmem>>, vector<1x32xf32>
    %42 = arith.addf %38, %41 : vector<1x32xf32>
    %c10 = arith.constant 10 : index
    %43 = memref.load %arg1[%c10] : memref<32xi32, #tpu.memory_space<smem>>
    %44 = arith.index_cast %43 : i32 to index
    %c0_15 = arith.constant 0 : index
    %45 = vector.load %arg2[%44, %c0_15] : memref<512x32xf32, #tpu.memory_space<vmem>>, vector<1x32xf32>
    %46 = arith.addf %42, %45 : vector<1x32xf32>
    %c11 = arith.constant 11 : index
    %47 = memref.load %arg1[%c11] : memref<32xi32, #tpu.memory_space<smem>>
    %48 = arith.index_cast %47 : i32 to index
    %c0_16 = arith.constant 0 : index
    %49 = vector.load %arg2[%48, %c0_16] : memref<512x32xf32, #tpu.memory_space<vmem>>, vector<1x32xf32>
    %50 = arith.addf %46, %49 : vector<1x32xf32>
    %cst_17 = arith.constant 2.500000e-01 : f32
    %51 = vector.broadcast %cst_17 : f32 to vector<1x32xf32>
    %52 = arith.mulf %50, %51 : vector<1x32xf32>
    %c2_18 = arith.constant 2 : index
    %c0_19 = arith.constant 0 : index
    %53 = vector.load %arg6[%c2_18, %c0_19] : memref<8x32xf32, #tpu.memory_space<vmem>>, vector<1x32xf32>
    tpu.vector_store %arg6[%c2_18, %c0_19], %52 {strides = array<i32>} : memref<8x32xf32, #tpu.memory_space<vmem>>, vector<1x32xf32>,
    %c12 = arith.constant 12 : index
    %54 = memref.load %arg1[%c12] : memref<32xi32, #tpu.memory_space<smem>>
    %55 = arith.index_cast %54 : i32 to index
    %c0_20 = arith.constant 0 : index
    %56 = vector.load %arg2[%55, %c0_20] : memref<512x32xf32, #tpu.memory_space<vmem>>, vector<1x32xf32>
    %c13 = arith.constant 13 : index
    %57 = memref.load %arg1[%c13] : memref<32xi32, #tpu.memory_space<smem>>
    %58 = arith.index_cast %57 : i32 to index
    %c0_21 = arith.constant 0 : index
    %59 = vector.load %arg2[%58, %c0_21] : memref<512x32xf32, #tpu.memory_space<vmem>>, vector<1x32xf32>
    %60 = arith.addf %56, %59 : vector<1x32xf32>
    %c14 = arith.constant 14 : index
    %61 = memref.load %arg1[%c14] : memref<32xi32, #tpu.memory_space<smem>>
    %62 = arith.index_cast %61 : i32 to index
    %c0_22 = arith.constant 0 : index
    %63 = vector.load %arg2[%62, %c0_22] : memref<512x32xf32, #tpu.memory_space<vmem>>, vector<1x32xf32>
    %64 = arith.addf %60, %63 : vector<1x32xf32>
    %c15 = arith.constant 15 : index
    %65 = memref.load %arg1[%c15] : memref<32xi32, #tpu.memory_space<smem>>
    %66 = arith.index_cast %65 : i32 to index
    %c0_23 = arith.constant 0 : index
    %67 = vector.load %arg2[%66, %c0_23] : memref<512x32xf32, #tpu.memory_space<vmem>>, vector<1x32xf32>
    %68 = arith.addf %64, %67 : vector<1x32xf32>
    %cst_24 = arith.constant 2.500000e-01 : f32
    %69 = vector.broadcast %cst_24 : f32 to vector<1x32xf32>
    %70 = arith.mulf %68, %69 : vector<1x32xf32>
    %c3_25 = arith.constant 3 : index
    %c0_26 = arith.constant 0 : index
    %71 = vector.load %arg6[%c3_25, %c0_26] : memref<8x32xf32, #tpu.memory_space<vmem>>, vector<1x32xf32>
    tpu.vector_store %arg6[%c3_25, %c0_26], %70 {strides = array<i32>} : memref<8x32xf32, #tpu.memory_space<vmem>>, vector<1x32xf32>,
    %c16 = arith.constant 16 : index
    %72 = memref.load %arg1[%c16] : memref<32xi32, #tpu.memory_space<smem>>
    %73 = arith.index_cast %72 : i32 to index
    %c0_27 = arith.constant 0 : index
    %74 = vector.load %arg2[%73, %c0_27] : memref<512x32xf32, #tpu.memory_space<vmem>>, vector<1x32xf32>
    %c17 = arith.constant 17 : index
    %75 = memref.load %arg1[%c17] : memref<32xi32, #tpu.memory_space<smem>>
    %76 = arith.index_cast %75 : i32 to index
    %c0_28 = arith.constant 0 : index
    %77 = vector.load %arg2[%76, %c0_28] : memref<512x32xf32, #tpu.memory_space<vmem>>, vector<1x32xf32>
    %78 = arith.addf %74, %77 : vector<1x32xf32>
    %c18 = arith.constant 18 : index
    %79 = memref.load %arg1[%c18] : memref<32xi32, #tpu.memory_space<smem>>
    %80 = arith.index_cast %79 : i32 to index
    %c0_29 = arith.constant 0 : index
    %81 = vector.load %arg2[%80, %c0_29] : memref<512x32xf32, #tpu.memory_space<vmem>>, vector<1x32xf32>
    %82 = arith.addf %78, %81 : vector<1x32xf32>
    %c19 = arith.constant 19 : index
    %83 = memref.load %arg1[%c19] : memref<32xi32, #tpu.memory_space<smem>>
    %84 = arith.index_cast %83 : i32 to index
    %c0_30 = arith.constant 0 : index
    %85 = vector.load %arg2[%84, %c0_30] : memref<512x32xf32, #tpu.memory_space<vmem>>, vector<1x32xf32>
    %86 = arith.addf %82, %85 : vector<1x32xf32>
    %cst_31 = arith.constant 2.500000e-01 : f32
    %87 = vector.broadcast %cst_31 : f32 to vector<1x32xf32>
    %88 = arith.mulf %86, %87 : vector<1x32xf32>
    %c4_32 = arith.constant 4 : index
    %c0_33 = arith.constant 0 : index
    %89 = vector.load %arg6[%c4_32, %c0_33] : memref<8x32xf32, #tpu.memory_space<vmem>>, vector<1x32xf32>
    tpu.vector_store %arg6[%c4_32, %c0_33], %88 {strides = array<i32>} : memref<8x32xf32, #tpu.memory_space<vmem>>, vector<1x32xf32>,
    %c20 = arith.constant 20 : index
    %90 = memref.load %arg1[%c20] : memref<32xi32, #tpu.memory_space<smem>>
    %91 = arith.index_cast %90 : i32 to index
    %c0_34 = arith.constant 0 : index
    %92 = vector.load %arg2[%91, %c0_34] : memref<512x32xf32, #tpu.memory_space<vmem>>, vector<1x32xf32>
    %c21 = arith.constant 21 : index
    %93 = memref.load %arg1[%c21] : memref<32xi32, #tpu.memory_space<smem>>
    %94 = arith.index_cast %93 : i32 to index
    %c0_35 = arith.constant 0 : index
    %95 = vector.load %arg2[%94, %c0_35] : memref<512x32xf32, #tpu.memory_space<vmem>>, vector<1x32xf32>
    %96 = arith.addf %92, %95 : vector<1x32xf32>
    %c22 = arith.constant 22 : index
    %97 = memref.load %arg1[%c22] : memref<32xi32, #tpu.memory_space<smem>>
    %98 = arith.index_cast %97 : i32 to index
    %c0_36 = arith.constant 0 : index
    %99 = vector.load %arg2[%98, %c0_36] : memref<512x32xf32, #tpu.memory_space<vmem>>, vector<1x32xf32>
    %100 = arith.addf %96, %99 : vector<1x32xf32>
    %c23 = arith.constant 23 : index
    %101 = memref.load %arg1[%c23] : memref<32xi32, #tpu.memory_space<smem>>
    %102 = arith.index_cast %101 : i32 to index
    %c0_37 = arith.constant 0 : index
    %103 = vector.load %arg2[%102, %c0_37] : memref<512x32xf32, #tpu.memory_space<vmem>>, vector<1x32xf32>
    %104 = arith.addf %100, %103 : vector<1x32xf32>
    %cst_38 = arith.constant 2.500000e-01 : f32
    %105 = vector.broadcast %cst_38 : f32 to vector<1x32xf32>
    %106 = arith.mulf %104, %105 : vector<1x32xf32>
    %c5_39 = arith.constant 5 : index
    %c0_40 = arith.constant 0 : index
    %107 = vector.load %arg6[%c5_39, %c0_40] : memref<8x32xf32, #tpu.memory_space<vmem>>, vector<1x32xf32>
    tpu.vector_store %arg6[%c5_39, %c0_40], %106 {strides = array<i32>} : memref<8x32xf32, #tpu.memory_space<vmem>>, vector<1x32xf32>,
    %c24 = arith.constant 24 : index
    %108 = memref.load %arg1[%c24] : memref<32xi32, #tpu.memory_space<smem>>
    %109 = arith.index_cast %108 : i32 to index
    %c0_41 = arith.constant 0 : index
    %110 = vector.load %arg2[%109, %c0_41] : memref<512x32xf32, #tpu.memory_space<vmem>>, vector<1x32xf32>
    %c25 = arith.constant 25 : index
    %111 = memref.load %arg1[%c25] : memref<32xi32, #tpu.memory_space<smem>>
    %112 = arith.index_cast %111 : i32 to index
    %c0_42 = arith.constant 0 : index
    %113 = vector.load %arg2[%112, %c0_42] : memref<512x32xf32, #tpu.memory_space<vmem>>, vector<1x32xf32>
    %114 = arith.addf %110, %113 : vector<1x32xf32>
    %c26 = arith.constant 26 : index
    %115 = memref.load %arg1[%c26] : memref<32xi32, #tpu.memory_space<smem>>
    %116 = arith.index_cast %115 : i32 to index
    %c0_43 = arith.constant 0 : index
    %117 = vector.load %arg2[%116, %c0_43] : memref<512x32xf32, #tpu.memory_space<vmem>>, vector<1x32xf32>
    %118 = arith.addf %114, %117 : vector<1x32xf32>
    %c27 = arith.constant 27 : index
    %119 = memref.load %arg1[%c27] : memref<32xi32, #tpu.memory_space<smem>>
    %120 = arith.index_cast %119 : i32 to index
    %c0_44 = arith.constant 0 : index
    %121 = vector.load %arg2[%120, %c0_44] : memref<512x32xf32, #tpu.memory_space<vmem>>, vector<1x32xf32>
    %122 = arith.addf %118, %121 : vector<1x32xf32>
    %cst_45 = arith.constant 2.500000e-01 : f32
    %123 = vector.broadcast %cst_45 : f32 to vector<1x32xf32>
    %124 = arith.mulf %122, %123 : vector<1x32xf32>
    %c6_46 = arith.constant 6 : index
    %c0_47 = arith.constant 0 : index
    %125 = vector.load %arg6[%c6_46, %c0_47] : memref<8x32xf32, #tpu.memory_space<vmem>>, vector<1x32xf32>
    tpu.vector_store %arg6[%c6_46, %c0_47], %124 {strides = array<i32>} : memref<8x32xf32, #tpu.memory_space<vmem>>, vector<1x32xf32>,
    %c28 = arith.constant 28 : index
    %126 = memref.load %arg1[%c28] : memref<32xi32, #tpu.memory_space<smem>>
    %127 = arith.index_cast %126 : i32 to index
    %c0_48 = arith.constant 0 : index
    %128 = vector.load %arg2[%127, %c0_48] : memref<512x32xf32, #tpu.memory_space<vmem>>, vector<1x32xf32>
    %c29 = arith.constant 29 : index
    %129 = memref.load %arg1[%c29] : memref<32xi32, #tpu.memory_space<smem>>
    %130 = arith.index_cast %129 : i32 to index
    %c0_49 = arith.constant 0 : index
    %131 = vector.load %arg2[%130, %c0_49] : memref<512x32xf32, #tpu.memory_space<vmem>>, vector<1x32xf32>
    %132 = arith.addf %128, %131 : vector<1x32xf32>
    %c30 = arith.constant 30 : index
    %133 = memref.load %arg1[%c30] : memref<32xi32, #tpu.memory_space<smem>>
    %134 = arith.index_cast %133 : i32 to index
    %c0_50 = arith.constant 0 : index
    %135 = vector.load %arg2[%134, %c0_50] : memref<512x32xf32, #tpu.memory_space<vmem>>, vector<1x32xf32>
    %136 = arith.addf %132, %135 : vector<1x32xf32>
    %c31 = arith.constant 31 : index
    %137 = memref.load %arg1[%c31] : memref<32xi32, #tpu.memory_space<smem>>
    %138 = arith.index_cast %137 : i32 to index
    %c0_51 = arith.constant 0 : index
    %139 = vector.load %arg2[%138, %c0_51] : memref<512x32xf32, #tpu.memory_space<vmem>>, vector<1x32xf32>
    %140 = arith.addf %136, %139 : vector<1x32xf32>
    %cst_52 = arith.constant 2.500000e-01 : f32
    %141 = vector.broadcast %cst_52 : f32 to vector<1x32xf32>
    %142 = arith.mulf %140, %141 : vector<1x32xf32>
    %c7_53 = arith.constant 7 : index
    %c0_54 = arith.constant 0 : index
    %143 = vector.load %arg6[%c7_53, %c0_54] : memref<8x32xf32, #tpu.memory_space<vmem>>, vector<1x32xf32>
    tpu.vector_store %arg6[%c7_53, %c0_54], %142 {strides = array<i32>} : memref<8x32xf32, #tpu.memory_space<vmem>>, vector<1x32xf32>,
    %c0_55 = arith.constant 0 : index
    %c0_56 = arith.constant 0 : index
    %144 = vector.load %arg6[%c0_55, %c0_56] : memref<8x32xf32, #tpu.memory_space<vmem>>, vector<8x32xf32>
    %145 = arith.truncf %144 : vector<8x32xf32> to vector<8x32xbf16>
    %c0_57 = arith.constant 0 : index
    %c0_58 = arith.constant 0 : index
    %146 = vector.load %arg3[%c0_57, %c0_58] : memref<32x512xbf16, #tpu.memory_space<vmem>>, vector<32x512xbf16>
    %cst_59 = arith.constant dense<0.000000e+00> : vector<8x512xf32>
    %147 = tpu.matmul %145, %146, %cst_59 {dimension_numbers = #tpu.dot_dimension_numbers<[1], [0], [0], [1], [0, 0, 1, 1], [], []>} : vector<8x32xbf16>, vector<32x512xbf16>, vector<8x512xf32> -> vector<8x512xf32>
    %c0_60 = arith.constant 0 : index
    %c0_61 = arith.constant 0 : index
    %148 = vector.load %arg4[%c0_60, %c0_61] : memref<1x512xf32, #tpu.memory_space<vmem>>, vector<1x512xf32>
    %149 = vector.broadcast %148 : vector<1x512xf32> to vector<8x512xf32>
    %150 = arith.addf %147, %149 : vector<8x512xf32>
    %c0_62 = arith.constant 0 : index
    %c0_63 = arith.constant 0 : index
    %151 = vector.load %arg5[%c0_62, %c0_63] : memref<8x512xf32, #tpu.memory_space<vmem>>, vector<8x512xf32>
    tpu.vector_store %arg5[%c0_62, %c0_63], %150 {strides = array<i32>} : memref<8x512xf32, #tpu.memory_space<vmem>>, vector<8x512xf32>,
    return
  }
  func.func @transform_0(%arg0: i32, %arg1: memref<32xi32, #tpu.memory_space<smem>>) -> (i32, i32) {
    %c0_i32 = arith.constant 0 : i32
    %c0_i32_0 = arith.constant 0 : i32
    %c0_i32_1 = arith.constant 0 : i32
    return %c0_i32, %c0_i32_0 : i32, i32
  }
  func.func @transform_1(%arg0: i32, %arg1: memref<32xi32, #tpu.memory_space<smem>>) -> (i32, i32) {
    %c0_i32 = arith.constant 0 : i32
    %c0_i32_0 = arith.constant 0 : i32
    return %c0_i32, %arg0 : i32, i32
  }
  func.func @transform_2(%arg0: i32, %arg1: memref<32xi32, #tpu.memory_space<smem>>) -> (i32, i32) {
    %c0_i32 = arith.constant 0 : i32
    %c0_i32_0 = arith.constant 0 : i32
    return %c0_i32, %arg0 : i32, i32
  }
  func.func @transform_3(%arg0: i32, %arg1: memref<32xi32, #tpu.memory_space<smem>>) -> (i32, i32) {
    %c0_i32 = arith.constant 0 : i32
    %c0_i32_0 = arith.constant 0 : i32
    return %c0_i32, %arg0 : i32, i32
  }
}

</mosaic_0001>

<llo_original>
// kernel: cbow_forward.1
$region0: #{cbow_forward.1}
  #allocation0 [shape = 'u32[]', space=smem, size = 0x4, offset = 0x4, fixed_abs, tag = 'smem constant byte address 0x4 - core index']
  #allocation1 [shape = 'u32[144,128]{1,0:T(1,128)}', space=vmem, size = 0x12000, scoped, tag = 'internal scratch']
  #allocation2 [shape = 'f32[8,32]{1,0:T(8,128)}', space=vmem, size = 0x1000, scoped, tag = 'scratch operand']
  #allocation3 [shape = 's32[1]{0}', space=sflag, size = 0x4, scoped, tag = 'scoped memory for cbow_forward.1']
  #allocation4 [shape = 'u8[512]{0}', space=smem, size = 0x200, scoped, tag = 'prefetched SMEM operand 0']
  %s0 = inlined_call_operand.vmem [shape: s32[32], index: 0, kind: input, shape index: {}]
  %s1 = inlined_call_operand.vmem [shape: f32[512,32], index: 1, kind: input, shape index: {}]
  %s2 = inlined_call_operand.vmem [shape: bf16[32,512], index: 2, kind: input, shape index: {}]
  %s3 = inlined_call_operand.vmem [shape: f32[1,512], index: 3, kind: input, shape index: {}]
  %s4 = inlined_call_operand.hbm [shape: f32[8,512], index: 4, kind: output, shape index: {}]
  %s5 = sld [smem:[#allocation0]]
  $region22: #{cbow_forward.1} parent=0
    _
  %s7 = ssub.s32 1, %s5
  %s8 = scalar_select 0, %s7, %s5
  %s9 = sshll.u32 %s0, 4
  %s10 = int_to_ptr.vmem [resolvable:$true] %s9
  %12 = dma.vmem_to_smem %s10, 16, [#allocation4], [#allocation3]
  %13 = dma.done [#allocation3], 16
  %14 = sfence
  $region1: #{cbow_forward.1} parent=0
    #allocation5 [shape = 'u8[16384]{0}', space=vmem, size = 0x4000, scoped, tag = 'output window, operand 0, single buffered']
    #allocation6 [shape = 's32[1]{0}', space=sflag, size = 0x4, scoped, tag = 'scoped memory for cbow_forward.1']
    %15 = vsyncpa [#allocation6], 0
    // Predicated region
    $region2: #{cbow_forward.1} parent=1 // pred_check
      _
    $region3: #{cbow_forward.1} parent=1 // pred_check_branch
      %17 = sbr.rel (0) target = $region5
    $region4: #{cbow_forward.1} parent=1 // pred_region
      _
    $region5: #{cbow_forward.1} parent=1 // pred_fallthru
      _
    // Predicated region
    $region6: #{cbow_forward.1} parent=1 // pred_check
      _
    $region7: #{cbow_forward.1} parent=1 // pred_check_branch
      %19 = sbr.rel (0) target = $region9
    $region8: #{cbow_forward.1} parent=1 // pred_region
      _
    $region9: #{cbow_forward.1} parent=1 // pred_fallthru
      _
    // Predicated region
    $region10: #{cbow_forward.1} parent=1 // pred_check
      _
    $region11: #{cbow_forward.1} parent=1 // pred_check_branch
      %21 = sbr.rel (0) target = $region13
    $region12: #{cbow_forward.1} parent=1 // pred_region
      _
    $region13: #{cbow_forward.1} parent=1 // pred_fallthru
      _
    %s23 = sld [smem:[#allocation4]]
    %s24 = scalar_lea.vmem %s1, %s23
    %v25 = vld [vmem:[%s24] sm:$0x1]
    %s26 = sld [smem:[#allocation4 + $0x1]]
    %s27 = scalar_lea.vmem %s1, %s26
    %v28 = vld [vmem:[%s27] sm:$0x1]
    %v29 = vadd.f32 %v25, %v28
    %s30 = sld [smem:[#allocation4 + $0x2]]
    %s31 = scalar_lea.vmem %s1, %s30
    %v32 = vld [vmem:[%s31] sm:$0x1]
    %v33 = vadd.f32 %v29, %v32
    %s34 = sld [smem:[#allocation4 + $0x3]]
    %s35 = scalar_lea.vmem %s1, %s34
    %v36 = vld [vmem:[%s35] sm:$0x1]
    %v37 = vadd.f32 %v33, %v36
    %v38 = vmul.f32 %v37, 0.25
    %vm39 = vcmask 253952
    %40 = vst.msk [vmem:[#allocation2] sm:$0x1] %vm39, %v38
    %s41 = sld [smem:[#allocation4 + $0x4]]
    %s42 = scalar_lea.vmem %s1, %s41
    %v43 = vld [vmem:[%s42] sm:$0x1]
    %s44 = sld [smem:[#allocation4 + $0x5]]
    %s45 = scalar_lea.vmem %s1, %s44
    %v46 = vld [vmem:[%s45] sm:$0x1]
    %v47 = vadd.f32 %v43, %v46
    %s48 = sld [smem:[#allocation4 + $0x6]]
    %s49 = scalar_lea.vmem %s1, %s48
    %v50 = vld [vmem:[%s49] sm:$0x1]
    %v51 = vadd.f32 %v47, %v50
    %s52 = sld [smem:[#allocation4 + $0x7]]
    %s53 = scalar_lea.vmem %s1, %s52
    %v54 = vld [vmem:[%s53] sm:$0x1]
    %v55 = vadd.f32 %v51, %v54
    %v56 = vmul.f32 %v55, 0.25
    %57 = vst.msk [vmem:[#allocation2 + $0x1] sm:$0x1] %vm39, %v56
    %s58 = sld [smem:[#allocation4 + $0x8]]
    %s59 = scalar_lea.vmem %s1, %s58
    %v60 = vld [vmem:[%s59] sm:$0x1]
    %s61 = sld [smem:[#allocation4 + $0x9]]
    %s62 = scalar_lea.vmem %s1, %s61
    %v63 = vld [vmem:[%s62] sm:$0x1]
    %v64 = vadd.f32 %v60, %v63
    %s65 = sld [smem:[#allocation4 + $0xa]]
    %s66 = scalar_lea.vmem %s1, %s65
    %v67 = vld [vmem:[%s66] sm:$0x1]
    %v68 = vadd.f32 %v64, %v67
    %s69 = sld [smem:[#allocation4 + $0xb]]
    %s70 = scalar_lea.vmem %s1, %s69
    %v71 = vld [vmem:[%s70] sm:$0x1]
    %v72 = vadd.f32 %v68, %v71
    %v73 = vmul.f32 %v72, 0.25
    %74 = vst.msk [vmem:[#allocation2 + $0x2] sm:$0x1] %vm39, %v73
    %s75 = sld [smem:[#allocation4 + $0xc]]
    %s76 = scalar_lea.vmem %s1, %s75
    %v77 = vld [vmem:[%s76] sm:$0x1]
    %s78 = sld [smem:[#allocation4 + $0xd]]
    %s79 = scalar_lea.vmem %s1, %s78
    %v80 = vld [vmem:[%s79] sm:$0x1]
    %v81 = vadd.f32 %v77, %v80
    %s82 = sld [smem:[#allocation4 + $0xe]]
    %s83 = scalar_lea.vmem %s1, %s82
    %v84 = vld [vmem:[%s83] sm:$0x1]
    %v85 = vadd.f32 %v81, %v84
    %s86 = sld [smem:[#allocation4 + $0xf]]
    %s87 = scalar_lea.vmem %s1, %s86
    %v88 = vld [vmem:[%s87] sm:$0x1]
    %v89 = vadd.f32 %v85, %v88
    %v90 = vmul.f32 %v89, 0.25
    %91 = vst.msk [vmem:[#allocation2 + $0x3] sm:$0x1] %vm39, %v90
    %s92 = sld [smem:[#allocation4 + $0x10]]
    %s93 = scalar_lea.vmem %s1, %s92
    %v94 = vld [vmem:[%s93] sm:$0x1]
    %s95 = sld [smem:[#allocation4 + $0x11]]
    %s96 = scalar_lea.vmem %s1, %s95
    %v97 = vld [vmem:[%s96] sm:$0x1]
    %v98 = vadd.f32 %v94, %v97
    %s99 = sld [smem:[#allocation4 + $0x12]]
    %s100 = scalar_lea.vmem %s1, %s99
    %v101 = vld [vmem:[%s100] sm:$0x1]
    %v102 = vadd.f32 %v98, %v101
    %s103 = sld [smem:[#allocation4 + $0x13]]
    %s104 = scalar_lea.vmem %s1, %s103
    %v105 = vld [vmem:[%s104] sm:$0x1]
    %v106 = vadd.f32 %v102, %v105
    %v107 = vmul.f32 %v106, 0.25
    %108 = vst.msk [vmem:[#allocation2 + $0x4] sm:$0x1] %vm39, %v107
    %s109 = sld [smem:[#allocation4 + $0x14]]
    %s110 = scalar_lea.vmem %s1, %s109
    %v111 = vld [vmem:[%s110] sm:$0x1]
    %s112 = sld [smem:[#allocation4 + $0x15]]
    %s113 = scalar_lea.vmem %s1, %s112
    %v114 = vld [vmem:[%s113] sm:$0x1]
    %v115 = vadd.f32 %v111, %v114
    %s116 = sld [smem:[#allocation4 + $0x16]]
    %s117 = scalar_lea.vmem %s1, %s116
    %v118 = vld [vmem:[%s117] sm:$0x1]
    %v119 = vadd.f32 %v115, %v118
    %s120 = sld [smem:[#allocation4 + $0x17]]
    %s121 = scalar_lea.vmem %s1, %s120
    %v122 = vld [vmem:[%s121] sm:$0x1]
    %v123 = vadd.f32 %v119, %v122
    %v124 = vmul.f32 %v123, 0.25
    %125 = vst.msk [vmem:[#allocation2 + $0x5] sm:$0x1] %vm39, %v124
    %s126 = sld [smem:[#allocation4 + $0x18]]
    %s127 = scalar_lea.vmem %s1, %s126
    %v128 = vld [vmem:[%s127] sm:$0x1]
    %s129 = sld [smem:[#allocation4 + $0x19]]
    %s130 = scalar_lea.vmem %s1, %s129
    %v131 = vld [vmem:[%s130] sm:$0x1]
    %v132 = vadd.f32 %v128, %v131
    %s133 = sld [smem:[#allocation4 + $0x1a]]
    %s134 = scalar_lea.vmem %s1, %s133
    %v135 = vld [vmem:[%s134] sm:$0x1]
    %v136 = vadd.f32 %v132, %v135
    %s137 = sld [smem:[#allocation4 + $0x1b]]
    %s138 = scalar_lea.vmem %s1, %s137
    %v139 = vld [vmem:[%s138] sm:$0x1]
    %v140 = vadd.f32 %v136, %v139
    %v141 = vmul.f32 %v140, 0.25
    %142 = vst.msk [vmem:[#allocation2 + $0x6] sm:$0x1] %vm39, %v141
    %s143 = sld [smem:[#allocation4 + $0x1c]]
    %s144 = scalar_lea.vmem %s1, %s143
    %v145 = vld [vmem:[%s144] sm:$0x1]
    %s146 = sld [smem:[#allocation4 + $0x1d]]
    %s147 = scalar_lea.vmem %s1, %s146
    %v148 = vld [vmem:[%s147] sm:$0x1]
    %v149 = vadd.f32 %v145, %v148
    %s150 = sld [smem:[#allocation4 + $0x1e]]
    %s151 = scalar_lea.vmem %s1, %s150
    %v152 = vld [vmem:[%s151] sm:$0x1]
    %v153 = vadd.f32 %v149, %v152
    %s154 = sld [smem:[#allocation4 + $0x1f]]
    %s155 = scalar_lea.vmem %s1, %s154
    %v156 = vld [vmem:[%s155] sm:$0x1]
    %v157 = vadd.f32 %v153, %v156
    %v158 = vmul.f32 %v157, 0.25
    %159 = vst.msk [vmem:[#allocation2 + $0x7] sm:$0x1] %vm39, %v158
    %v160 = vld [vmem:[#allocation2] sm:$0xff]
    %v161 = vpack.c.bf16 %v160, %v160
    %v162 = vld [vmem:[%s2] sm:$0xff]
    %v163 = vld [vmem:[%s2 + $0x8] sm:$0xff]
    %v164 = vld [vmem:[%s2 + $0x10] sm:$0xff]
    %v165 = vld [vmem:[%s2 + $0x18] sm:$0xff]
    %v166 = vld [vmem:[%s2 + $0x20] sm:$0xff]
    %v167 = vld [vmem:[%s2 + $0x28] sm:$0xff]
    %v168 = vld [vmem:[%s2 + $0x30] sm:$0xff]
    %v169 = vld [vmem:[%s2 + $0x38] sm:$0xff]
    %v170 = vld [vmem:[%s3] sm:$0xf]
    %v172 = vlaneseq
    %v173 = vshrl.u32 %v172, 7
    %v174 = vsub.s32 0, %v173
    %v175 = vrot.slane %v170, %v174
    %v176 = vlaneseq
    %v177 = vshrl.u32 %v176, 7
    %v178 = vsub.s32 1, %v177
    %v179 = vrot.slane %v170, %v178
    %v180 = vlaneseq
    %v181 = vshrl.u32 %v180, 7
    %v182 = vsub.s32 2, %v181
    %v183 = vrot.slane %v170, %v182
    %v184 = vlaneseq
    %v185 = vshrl.u32 %v184, 7
    %v186 = vsub.s32 3, %v185
    %v187 = vrot.slane %v170, %v186
    %v200 = vunpack.c.l.b16 %v162
    %v201 = vunpack.c.h.b16 %v162
    %v202 = vunpack.c.l.b16 %v163
    %v203 = vunpack.c.h.b16 %v163
    %v204 = vunpack.c.l.b16 %v164
    %v205 = vunpack.c.h.b16 %v164
    %v206 = vunpack.c.l.b16 %v165
    %v207 = vunpack.c.h.b16 %v165
    %v208 = vunpack.c.l.b16 %v166
    %v209 = vunpack.c.h.b16 %v166
    %v210 = vunpack.c.l.b16 %v167
    %v211 = vunpack.c.h.b16 %v167
    %v212 = vunpack.c.l.b16 %v168
    %v213 = vunpack.c.h.b16 %v168
    %v214 = vunpack.c.l.b16 %v169
    %v215 = vunpack.c.h.b16 %v169
    %v216 = vpack.c.b16 %v204, %v200
    %v217 = vpack.c.b16 %v205, %v201
    %v218 = vpack.c.b16 %v206, %v202
    %v219 = vpack.c.b16 %v207, %v203
    %v220 = vpack.c.b16 %v212, %v208
    %v221 = vpack.c.b16 %v213, %v209
    %v222 = vpack.c.b16 %v214, %v210
    %v223 = vpack.c.b16 %v215, %v211
    %vm232 = vcmask 261120
    %v234 = vsel %vm232, %v161, 0
    %236 = vmatprep.subr.bf16.mxu0 0
    %237 = vmatpush1.bf16.msra.mxu0 0
    %238 = vmatprep.subr.bf16.mxu0 0
    %239 = vmatpush1.bf16.msra.mxu0 0
    %240 = vmatprep.subr.bf16.mxu0 0
    %241 = vmatpush1.bf16.msra.mxu0 0
    %242 = vmatprep.subr.bf16.mxu0 0
    %243 = vmatpush1.bf16.msra.mxu0 0
    %244 = vmatprep.subr.bf16.mxu0 0
    %245 = vmatpush1.bf16.msra.mxu0 0
    %246 = vmatprep.subr.bf16.mxu0 0
    %247 = vmatpush1.bf16.msra.mxu0 0
    %248 = vmatprep.subr.bf16.mxu0 %v221
    %249 = vmatpush1.bf16.msra.mxu0 %v220
    %250 = vmatprep.subr.bf16.mxu0 %v217
    %251 = vmatpush1.bf16.msra.mxu0 %v216
    %252 = vmatprep.subr.bf16.mxu0 0
    %253 = vmatpush2.bf16.msra.mxu0 0
    %254 = vmatprep.subr.bf16.mxu0 0
    %255 = vmatpush2.bf16.msra.mxu0 0
    %256 = vmatprep.subr.bf16.mxu0 0
    %257 = vmatpush2.bf16.msra.mxu0 0
    %258 = vmatprep.subr.bf16.mxu0 0
    %259 = vmatpush2.bf16.msra.mxu0 0
    %260 = vmatprep.subr.bf16.mxu0 0
    %261 = vmatpush2.bf16.msra.mxu0 0
    %262 = vmatprep.subr.bf16.mxu0 0
    %263 = vmatpush2.bf16.msra.mxu0 0
    %264 = vmatprep.subr.bf16.mxu0 0
    %265 = vmatpush2.bf16.msra.mxu0 0
    %266 = vmatprep.subr.bf16.mxu0 0
    %267 = vmatpush2.bf16.msra.mxu0 0
    %268 = vmatprep.mubr.bf16.mxu0 0
    %269 = vmatmul.mubr.bf16.gmra.mxu0 %v234
    %v270 = vpop.f32.mrf.mxu0
    %v271 = vadd.f32 %v175, %v270
    %v272 = vpop.f32.mrf.mxu0
    %v273 = vadd.f32 %v179, %v272
    %v274 = vpop.f32.mrf.mxu0
    %v275 = vpop.f32.mrf.mxu0
    %276 = vdwg.mxu0
    %277 = vmatprep.subr.bf16.mxu0 0
    %278 = vmatpush1.bf16.msra.mxu0 0
    %279 = vmatprep.subr.bf16.mxu0 0
    %280 = vmatpush1.bf16.msra.mxu0 0
    %281 = vmatprep.subr.bf16.mxu0 0
    %282 = vmatpush1.bf16.msra.mxu0 0
    %283 = vmatprep.subr.bf16.mxu0 0
    %284 = vmatpush1.bf16.msra.mxu0 0
    %285 = vmatprep.subr.bf16.mxu0 0
    %286 = vmatpush1.bf16.msra.mxu0 0
    %287 = vmatprep.subr.bf16.mxu0 0
    %288 = vmatpush1.bf16.msra.mxu0 0
    %289 = vmatprep.subr.bf16.mxu0 %v223
    %290 = vmatpush1.bf16.msra.mxu0 %v222
    %291 = vmatprep.subr.bf16.mxu0 %v219
    %292 = vmatpush1.bf16.msra.mxu0 %v218
    %293 = vmatprep.subr.bf16.mxu0 0
    %294 = vmatpush2.bf16.msra.mxu0 0
    %295 = vmatprep.subr.bf16.mxu0 0
    %296 = vmatpush2.bf16.msra.mxu0 0
    %297 = vmatprep.subr.bf16.mxu0 0
    %298 = vmatpush2.bf16.msra.mxu0 0
    %299 = vmatprep.subr.bf16.mxu0 0
    %300 = vmatpush2.bf16.msra.mxu0 0
    %301 = vmatprep.subr.bf16.mxu0 0
    %302 = vmatpush2.bf16.msra.mxu0 0
    %303 = vmatprep.subr.bf16.mxu0 0
    %304 = vmatpush2.bf16.msra.mxu0 0
    %305 = vmatprep.subr.bf16.mxu0 0
    %306 = vmatpush2.bf16.msra.mxu0 0
    %307 = vmatprep.subr.bf16.mxu0 0
    %308 = vmatpush2.bf16.msra.mxu0 0
    %309 = vmatprep.mubr.bf16.mxu0 0
    %310 = vmatmul.mubr.bf16.gmra.mxu0 %v234
    %v311 = vpop.f32.mrf.mxu0
    %v312 = vadd.f32 %v183, %v311
    %v313 = vpop.f32.mrf.mxu0
    %v314 = vadd.f32 %v187, %v313
    %v315 = vpop.f32.mrf.mxu0
    %v316 = vpop.f32.mrf.mxu0
    %317 = vdwg.mxu0
    %318 = vst [vmem:[#allocation5] sm:$0xff] %v271
    %319 = vst [vmem:[#allocation5 + $0x8] sm:$0xff] %v273
    %320 = vst [vmem:[#allocation5 + $0x10] sm:$0xff] %v312
    %321 = vst [vmem:[#allocation5 + $0x18] sm:$0xff] %v314
    // Predicated region
    $region14: #{cbow_forward.1} parent=1 // pred_check
      _
    $region15: #{cbow_forward.1} parent=1 // pred_check_branch
      %323 = sbr.rel (0) target = $region17
    $region16: #{cbow_forward.1} parent=1 // pred_region
      %s325 = ssub.s32 512, 512
      %326 = vsyncadd [#allocation6], %s325
      %s328 = sshll.u32 [#allocation5], 4
      %s329 = int_to_ptr.vmem [resolvable:$true] %s328
      %331 = dma.vmem_to_hbm [thread:$0]  %s329, 512, %s4, [#allocation6]
    $region17: #{cbow_forward.1} parent=1 // pred_fallthru
      _
    // Predicated region
    $region18: #{cbow_forward.1} parent=1 // pred_check
      _
    $region19: #{cbow_forward.1} parent=1 // pred_check_branch
      %333 = sbr.rel (0) target = $region21
    $region20: #{cbow_forward.1} parent=1 // pred_region
      %334 = dma.done [#allocation6], 512
    $region21: #{cbow_forward.1} parent=1 // pred_fallthru
      _
    %335 = vsyncpa [#allocation6], 1

</llo_original>
